<compile_context>
chip_gen: v7x
topology: tpu7x:2x2x1
jax: 0.10.0
libtpu: 0.0.40
codegen_flags: <defaults>
</compile_context>

<pallas_src>
import jax
import jax.numpy as jnp
from jax.experimental import pallas as pl
from jax.experimental.pallas import tpu as pltpu


def _make_gcc_dk_kernel(direction):
    # axis (within the (Ct, H, W) block) that gets averaged away
    reduce_axis = 2 if direction == 'H' else 1

    def kernel(x_ref, p_ref, out_ref):
        # Per-line mean over the reduced spatial axis, f32 accumulation.
        # No full-block f32 temp is materialized: the upcast is fused into
        # the reduce via dtype= (important for bf16 inputs / VMEM budget).
        line = jnp.mean(x_ref[0], axis=reduce_axis, dtype=jnp.float32)  # (Ct, L)
        # Mean-of-means is exact: every line has the same element count.
        glob = jnp.mean(line, axis=1, keepdims=True)                    # (Ct, 1)
        kin = line + glob                                               # (Ct, L)

        p = p_ref[...]            # (Ct, 8) packed f32 params
        w1 = p[:, 0:3]            # conv1 taps
        scale = p[:, 3:4]         # folded BatchNorm scale
        bias = p[:, 4:5]          # folded BatchNorm bias
        w2 = p[:, 5:8]            # conv2 taps

        def dwconv3(v, taps):
            # depthwise cross-correlation along L, kernel size 3, zero pad 1:
            #   out[l] = taps[0]*v[l-1] + taps[1]*v[l] + taps[2]*v[l+1]
            zero = jnp.zeros_like(v[:, :1])
            prev = jnp.concatenate([zero, v[:, :-1]], axis=1)
            nxt = jnp.concatenate([v[:, 1:], zero], axis=1)
            return taps[:, 0:1] * prev + taps[:, 1:2] * v + taps[:, 2:3] * nxt

        y = dwconv3(kin, w1)                                  # depthwise conv #1
        y = y * scale + bias                                  # folded BatchNorm2d
        y = y * jnp.clip(y + 3.0, 0.0, 6.0) * (1.0 / 6.0)     # Hardswish
        y = dwconv3(y, w2)                                    # depthwise conv #2

        out_ref[...] = y[None].astype(out_ref.dtype)          # (1, Ct, L)

    return kernel


def _vmem_capacity_bytes():
    """Per-TensorCore VMEM capacity (generation-aware), with a safe fallback."""
    try:
        return int(pltpu.get_tpu_info().vmem_capacity_bytes)
    except Exception:
        return 64 * 1024 * 1024  # conservative: v7x per-TC VMEM


def _pick_channel_tile(B, C, H, W, itemsize, block_budget):
    """Largest channel tile that (a) divides C, (b) is a multiple of 8 or == C
    (TPU sublane constraint on the (Ct,8)/(1,Ct,L) blocks) and (c) keeps one
    (Ct, H, W) input block within the generation-aware VMEM block budget.
    Among fitting tiles, prefer the largest that still gives >= 4 grid steps
    so both v7x TensorCores stay busy on small batches."""
    per_chan = max(1, H * W * itemsize)
    cands = [d for d in range(1, C + 1)
             if C % d == 0 and (d % 8 == 0 or d == C)]
    fitting = [d for d in cands if d * per_chan <= block_budget] or [min(cands)]
    parallel = [d for d in fitting if B * (C // d) >= 4]
    return max(parallel) if parallel else max(fitting)


def gcc_dk_forward(x_nchw, w1, bn_gamma, bn_beta, bn_mean, bn_var, w2,
                   direction='H', eps=1e-5):
    """x_nchw: (B, C, H, W) float tensor.  w1/w2: depthwise conv weights
    (C,1,3,1) for 'H' or (C,1,1,3) for 'W' (bias=False).  BatchNorm params are
    the eval-mode (running) statistics.  Returns (B,C,H,1) / (B,C,1,W)."""
    B, C, H, W = x_nchw.shape
    if direction not in ('H', 'W'):
        raise ValueError(direction)
    L = H if direction == 'H' else W

    # Fold BatchNorm (inference) into per-channel scale/bias, pack all
    # per-channel params into a single (C, 8) f32 array:
    #   [w1_0, w1_1, w1_2, bn_scale, bn_bias, w2_0, w2_1, w2_2]
    inv_std = 1.0 / jnp.sqrt(bn_var.astype(jnp.float32) + eps)
    g = bn_gamma.astype(jnp.float32)
    scale = g * inv_std
    bias = bn_beta.astype(jnp.float32) - bn_mean.astype(jnp.float32) * scale
    w1k = jnp.reshape(w1, (C, 3)).astype(jnp.float32)
    w2k = jnp.reshape(w2, (C, 3)).astype(jnp.float32)
    params = jnp.concatenate(
        [w1k, scale[:, None], bias[:, None], w2k], axis=1)          # (C, 8)

    itemsize = x_nchw.dtype.itemsize
    capacity = _vmem_capacity_bytes()
    # Input block budget: ~1/5 of per-core VMEM (room for 2x double-buffered
    # input + output + params + in-kernel f32 line temps), capped at 16 MiB
    # (the measured mem-bound roofline plateau for large tiles).
    block_budget = max(1 << 20, min(16 << 20, capacity // 5))
    Ct = _pick_channel_tile(B, C, H, W, itemsize, block_budget)
    nc = C // Ct
    grid = (nc, B)   # batch innermost -> param block index constant, DMA elided

    in_block = Ct * H * W * itemsize
    out_block = Ct * L * itemsize
    param_block = Ct * 8 * 4
    temps = 8 * Ct * max(L, 128) * 4          # in-kernel f32 line/conv temps
    needed = 2 * in_block + 2 * out_block + 2 * param_block + temps + (2 << 20)
    vmem_limit = int(min(max(needed, 32 << 20), capacity - (4 << 20)))
    vmem_limit = max(vmem_limit, 16 << 20)

    cost = pl.CostEstimate(
        flops=int(2 * B * C * H * W + 14 * B * C * L),
        transcendentals=0,
        bytes_accessed=int(B * C * H * W * itemsize
                           + B * C * L * itemsize + C * 8 * 4))

    out = pl.pallas_call(
        _make_gcc_dk_kernel(direction),
        out_shape=jax.ShapeDtypeStruct((B, C, L), x_nchw.dtype),
        grid_spec=pltpu.PrefetchScalarGridSpec(
            num_scalar_prefetch=0,
            grid=grid,
            in_specs=[
                pl.BlockSpec((1, Ct, H, W), lambda c, b: (b, c, 0, 0)),  # x NCHW
                pl.BlockSpec((Ct, 8), lambda c, b: (c, 0)),              # params
            ],
            out_specs=pl.BlockSpec((1, Ct, L), lambda c, b: (b, c, 0)),
        ),
        compiler_params=pltpu.CompilerParams(
            dimension_semantics=("parallel", "parallel"),
            vmem_limit_bytes=vmem_limit),
        cost_estimate=cost,
    )(x_nchw, params)

    if direction == 'H':
        return out[..., None]            # (B, C, H, 1)
    else:
        return out[:, :, None, :]        # (B, C, 1, W)


def gcc_dk_reference(x_nchw, w1, bn_gamma, bn_beta, bn_mean, bn_var, w2,
                     direction='H', eps=1e-5):
    """Pure-JAX reference replicating the PyTorch module (BatchNorm eval mode)."""
    B, C, H, W = x_nchw.shape
    glob = jnp.mean(x_nchw, axis=(2, 3), keepdims=True)       # (B,C,1,1)
    if direction == 'H':
        info = jnp.mean(x_nchw, axis=3, keepdims=True)        # (B,C,H,1)
        kin = (info + glob)[..., 0]                            # (B,C,H)
    else:
        info = jnp.mean(x_nchw, axis=2, keepdims=True)        # (B,C,1,W)
        kin = (info + glob)[:, :, 0, :]                        # (B,C,W)
    taps1 = jnp.reshape(w1, (C, 3))
    taps2 = jnp.reshape(w2, (C, 3))

    def dwconv3(v, taps):  # v: (B,C,L), taps: (C,3)
        pad = jnp.pad(v, ((0, 0), (0, 0), (1, 1)))
        return (taps[None, :, 0:1] * pad[:, :, :-2]
                + taps[None, :, 1:2] * pad[:, :, 1:-1]
                + taps[None, :, 2:3] * pad[:, :, 2:])

    y = dwconv3(kin, taps1)
    scale = bn_gamma / jnp.sqrt(bn_var + eps)
    bias = bn_beta - bn_mean * scale
    y = y * scale[None, :, None] + bias[None, :, None]
    y = y * jnp.clip(y + 3.0, 0.0, 6.0) / 6.0
    y = dwconv3(y, taps2)
    if direction == 'H':
        return y[..., None]
    else:
        return y[:, :, None, :]


if __name__ == "__main__":
    B, C, H, W = 2, 4, 16, 16

    key = jax.random.PRNGKey(0)
    kx, kw1, kw2, kg, kb, km, kv = jax.random.split(key, 7)

    x = jax.random.normal(kx, (B, C, H, W), dtype=jnp.float32)
    # BatchNorm2d params (inference mode / running stats)
    bn_gamma = 1.0 + 0.1 * jax.random.normal(kg, (C,), dtype=jnp.float32)
    bn_beta = 0.1 * jax.random.normal(kb, (C,), dtype=jnp.float32)
    bn_mean = 0.1 * jax.random.normal(km, (C,), dtype=jnp.float32)
    bn_var = 1.0 + 0.1 * jnp.abs(jax.random.normal(kv, (C,), dtype=jnp.float32))

    for direction, wshape in (('H', (C, 1, 3, 1)), ('W', (C, 1, 1, 3))):
        w1 = jax.random.normal(kw1, wshape, dtype=jnp.float32) * 0.3
        w2 = jax.random.normal(kw2, wshape, dtype=jnp.float32) * 0.3

        out = gcc_dk_forward(x, w1, bn_gamma, bn_beta, bn_mean, bn_var, w2,
                             direction)
        out = jax.block_until_ready(out)
        ref = gcc_dk_reference(x, w1, bn_gamma, bn_beta, bn_mean, bn_var, w2,
                               direction)

        expected_shape = (B, C, H, 1) if direction == 'H' else (B, C, 1, W)
        assert out.shape == expected_shape, (direction, out.shape)
        max_err = float(jnp.max(jnp.abs(out - ref)))
        assert jnp.allclose(out, ref, atol=1e-5, rtol=1e-5), (direction, max_err)

    print("KERNEL_OK")
</pallas_src>

<mosaic_0001>
module attributes {stable_mosaic.version = 11 : i64} {
  func.func @kernel(%arg0: i32, %arg1: i32, %arg2: memref<1x4x16x16xf32, #tpu.memory_space<vmem>>, %arg3: memref<4x8xf32, #tpu.memory_space<vmem>>, %arg4: memref<1x4x16xf32, #tpu.memory_space<vmem>>) attributes {dimension_semantics = [#tpu.dimension_semantics<parallel>, #tpu.dimension_semantics<parallel>], iteration_bounds = array<i64: 1, 2>, scalar_prefetch = 0 : i64, scratch_operands = 0 : i64, tpu.core_type = #tpu.core_type<tc>, window_params = [{transform_indices = @transform_0, window_bounds = array<i64: 1, 4, 16, 16>}, {transform_indices = @transform_1, window_bounds = array<i64: 4, 8>}, {transform_indices = @transform_2, window_bounds = array<i64: 1, 4, 16>}]} {
    %c0 = arith.constant 0 : index
    %c0_0 = arith.constant 0 : index
    %c0_1 = arith.constant 0 : index
    %c0_2 = arith.constant 0 : index
    %0 = vector.load %arg2[%c0, %c0_0, %c0_1, %c0_2] : memref<1x4x16x16xf32, #tpu.memory_space<vmem>>, vector<1x4x16x16xf32>
    %1 = vector.shape_cast %0 : vector<1x4x16x16xf32> to vector<4x16x16xf32>
    %cst = arith.constant dense<0.000000e+00> : vector<4x16xf32>
    %2 = vector.multi_reduction <add>, %1, %cst [2] : vector<4x16x16xf32> to vector<4x16xf32>
    %cst_3 = arith.constant 1.600000e+01 : f32
    %3 = vector.broadcast %cst_3 : f32 to vector<4x16xf32>
    %4 = arith.divf %2, %3 : vector<4x16xf32>
    %cst_4 = arith.constant dense<0.000000e+00> : vector<4xf32>
    %5 = vector.multi_reduction <add>, %4, %cst_4 [1] : vector<4x16xf32> to vector<4xf32>
    %6 = vector.shape_cast %5 : vector<4xf32> to vector<4x1xf32>
    %cst_5 = arith.constant 1.600000e+01 : f32
    %7 = vector.broadcast %cst_5 : f32 to vector<4x1xf32>
    %8 = arith.divf %6, %7 : vector<4x1xf32>
    %9 = vector.broadcast %8 : vector<4x1xf32> to vector<4x16xf32>
    %10 = arith.addf %4, %9 : vector<4x16xf32>
    %c0_6 = arith.constant 0 : index
    %c0_7 = arith.constant 0 : index
    %11 = vector.load %arg3[%c0_6, %c0_7] : memref<4x8xf32, #tpu.memory_space<vmem>>, vector<4x8xf32>
    %12 = vector.extract_strided_slice %11 {offsets = [0, 0], sizes = [4, 3], strides = [1, 1]} : vector<4x8xf32> to vector<4x3xf32>
    %13 = vector.extract_strided_slice %11 {offsets = [0, 3], sizes = [4, 1], strides = [1, 1]} : vector<4x8xf32> to vector<4x1xf32>
    %14 = vector.extract_strided_slice %11 {offsets = [0, 4], sizes = [4, 1], strides = [1, 1]} : vector<4x8xf32> to vector<4x1xf32>
    %15 = vector.extract_strided_slice %11 {offsets = [0, 5], sizes = [4, 3], strides = [1, 1]} : vector<4x8xf32> to vector<4x3xf32>
    %cst_8 = arith.constant 0.000000e+00 : f32
    %16 = vector.broadcast %cst_8 : f32 to vector<4x1xf32>
    %17 = vector.extract_strided_slice %10 {offsets = [0, 0], sizes = [4, 15], strides = [1, 1]} : vector<4x16xf32> to vector<4x15xf32>
    %18 = tpu.concatenate %16, %17 in 1 : vector<4x1xf32>, vector<4x15xf32> -> vector<4x16xf32>
    %19 = vector.extract_strided_slice %10 {offsets = [0, 1], sizes = [4, 15], strides = [1, 1]} : vector<4x16xf32> to vector<4x15xf32>
    %20 = tpu.concatenate %19, %16 in 1 : vector<4x15xf32>, vector<4x1xf32> -> vector<4x16xf32>
    %21 = vector.extract_strided_slice %12 {offsets = [0, 0], sizes = [4, 1], strides = [1, 1]} : vector<4x3xf32> to vector<4x1xf32>
    %22 = vector.broadcast %21 : vector<4x1xf32> to vector<4x16xf32>
    %23 = arith.mulf %22, %18 : vector<4x16xf32>
    %24 = vector.extract_strided_slice %12 {offsets = [0, 1], sizes = [4, 1], strides = [1, 1]} : vector<4x3xf32> to vector<4x1xf32>
    %25 = vector.broadcast %24 : vector<4x1xf32> to vector<4x16xf32>
    %26 = arith.mulf %25, %10 : vector<4x16xf32>
    %27 = arith.addf %23, %26 : vector<4x16xf32>
    %28 = vector.extract_strided_slice %12 {offsets = [0, 2], sizes = [4, 1], strides = [1, 1]} : vector<4x3xf32> to vector<4x1xf32>
    %29 = vector.broadcast %28 : vector<4x1xf32> to vector<4x16xf32>
    %30 = arith.mulf %29, %20 : vector<4x16xf32>
    %31 = arith.addf %27, %30 : vector<4x16xf32>
    %32 = vector.broadcast %13 : vector<4x1xf32> to vector<4x16xf32>
    %33 = arith.mulf %31, %32 : vector<4x16xf32>
    %34 = vector.broadcast %14 : vector<4x1xf32> to vector<4x16xf32>
    %35 = arith.addf %33, %34 : vector<4x16xf32>
    %cst_9 = arith.constant 3.000000e+00 : f32
    %36 = vector.broadcast %cst_9 : f32 to vector<4x16xf32>
    %37 = arith.addf %35, %36 : vector<4x16xf32>
    %cst_10 = arith.constant 0.000000e+00 : f32
    %cst_11 = arith.constant 6.000000e+00 : f32
    %38 = vector.broadcast %cst_10 : f32 to vector<4x16xf32>
    %39 = arith.maximumf %38, %37 : vector<4x16xf32>
    %40 = vector.broadcast %cst_11 : f32 to vector<4x16xf32>
    %41 = arith.minimumf %40, %39 : vector<4x16xf32>
    %42 = arith.mulf %35, %41 : vector<4x16xf32>
    %cst_12 = arith.constant 0.166666672 : f32
    %43 = vector.broadcast %cst_12 : f32 to vector<4x16xf32>
    %44 = arith.mulf %42, %43 : vector<4x16xf32>
    %cst_13 = arith.constant 0.000000e+00 : f32
    %45 = vector.broadcast %cst_13 : f32 to vector<4x1xf32>
    %46 = vector.extract_strided_slice %44 {offsets = [0, 0], sizes = [4, 15], strides = [1, 1]} : vector<4x16xf32> to vector<4x15xf32>
    %47 = tpu.concatenate %45, %46 in 1 : vector<4x1xf32>, vector<4x15xf32> -> vector<4x16xf32>
    %48 = vector.extract_strided_slice %44 {offsets = [0, 1], sizes = [4, 15], strides = [1, 1]} : vector<4x16xf32> to vector<4x15xf32>
    %49 = tpu.concatenate %48, %45 in 1 : vector<4x15xf32>, vector<4x1xf32> -> vector<4x16xf32>
    %50 = vector.extract_strided_slice %15 {offsets = [0, 0], sizes = [4, 1], strides = [1, 1]} : vector<4x3xf32> to vector<4x1xf32>
    %51 = vector.broadcast %50 : vector<4x1xf32> to vector<4x16xf32>
    %52 = arith.mulf %51, %47 : vector<4x16xf32>
    %53 = vector.extract_strided_slice %15 {offsets = [0, 1], sizes = [4, 1], strides = [1, 1]} : vector<4x3xf32> to vector<4x1xf32>
    %54 = vector.broadcast %53 : vector<4x1xf32> to vector<4x16xf32>
    %55 = arith.mulf %54, %44 : vector<4x16xf32>
    %56 = arith.addf %52, %55 : vector<4x16xf32>
    %57 = vector.extract_strided_slice %15 {offsets = [0, 2], sizes = [4, 1], strides = [1, 1]} : vector<4x3xf32> to vector<4x1xf32>
    %58 = vector.broadcast %57 : vector<4x1xf32> to vector<4x16xf32>
    %59 = arith.mulf %58, %49 : vector<4x16xf32>
    %60 = arith.addf %56, %59 : vector<4x16xf32>
    %61 = vector.shape_cast %60 : vector<4x16xf32> to vector<1x4x16xf32>
    %c0_14 = arith.constant 0 : index
    %c0_15 = arith.constant 0 : index
    %c0_16 = arith.constant 0 : index
    %62 = vector.load %arg4[%c0_14, %c0_15, %c0_16] : memref<1x4x16xf32, #tpu.memory_space<vmem>>, vector<1x4x16xf32>
    tpu.vector_store %arg4[%c0_14, %c0_15, %c0_16], %61 {strides = array<i32>} : memref<1x4x16xf32, #tpu.memory_space<vmem>>, vector<1x4x16xf32>,
    return
  }
  func.func @transform_0(%arg0: i32, %arg1: i32) -> (i32, i32, i32, i32) {
    %c0_i32 = arith.constant 0 : i32
    %c0_i32_0 = arith.constant 0 : i32
    %c0_i32_1 = arith.constant 0 : i32
    return %arg1, %arg0, %c0_i32, %c0_i32_0 : i32, i32, i32, i32
  }
  func.func @transform_1(%arg0: i32, %arg1: i32) -> (i32, i32) {
    %c0_i32 = arith.constant 0 : i32
    %c0_i32_0 = arith.constant 0 : i32
    return %arg0, %c0_i32 : i32, i32
  }
  func.func @transform_2(%arg0: i32, %arg1: i32) -> (i32, i32, i32) {
    %c0_i32 = arith.constant 0 : i32
    %c0_i32_0 = arith.constant 0 : i32
    return %arg1, %arg0, %c0_i32 : i32, i32, i32
  }
}

</mosaic_0001>

<llo_original>
// kernel: tpu_custom_call.1
$region0: #{tpu_custom_call.1}
  #allocation0 [shape = 'u32[]', space=smem, size = 0x4, offset = 0x4, fixed_abs, tag = 'smem constant byte address 0x4 - core index']
  #allocation1 [shape = 'u32[144,128]{1,0:T(1,128)}', space=vmem, size = 0x12000, scoped, tag = 'internal scratch']
  %s0 = inlined_call_operand.hbm [shape: f32[2,4,16,16], index: 0, kind: input, shape index: {}]
  %s1 = inlined_call_operand.hbm [shape: f32[4,8], index: 1, kind: input, shape index: {}]
  %s2 = inlined_call_operand.hbm [shape: f32[2,4,16], index: 2, kind: output, shape index: {}]
  %s3 = sld [smem:[#allocation0]]
  $region49: #{tpu_custom_call.1} parent=0
    _
  %s5 = ssub.s32 1, %s3
  %s6 = scalar_select 0, %s5, %s3
  $region1: #{tpu_custom_call.1} parent=0
    #allocation2 [shape = 'u8[65536]{0}', space=vmem, size = 0x10000, scoped, tag = 'input window, operand 0']
    #allocation3 [shape = 's32[2]{0}', space=sflag, size = 0x8, scoped, tag = 'scoped memory for tpu_custom_call.1']
    #allocation4 [shape = 's32[2]{0}', space=sflag, size = 0x8, scoped, tag = 'scoped memory for tpu_custom_call.1']
    #allocation5 [shape = 'u8[2048]{0}', space=vmem, size = 0x800, scoped, tag = 'input window, operand 1, single buffered']
    #allocation6 [shape = 's32[1]{0}', space=sflag, size = 0x4, scoped, tag = 'scoped memory for tpu_custom_call.1']
    #allocation7 [shape = 'u8[4096]{0}', space=vmem, size = 0x1000, scoped, tag = 'output window, operand 0']
    %7 = vsyncpa [#allocation3], 0
    %s8 = scalar_lea.sflag [#allocation3], 1
    %9 = vsyncpa %s8, 0
    %10 = vsyncpa [#allocation6], 0
    %11 = vsyncpa [#allocation4], 0
    %s12 = scalar_lea.sflag [#allocation4], 1
    %13 = vsyncpa %s12, 0
    loop: start=0, step=1, limit=4
    $region2: #{tpu_custom_call.1} parent=1 // loop_pre_header
      _
    $region3: #{tpu_custom_call.1} parent=1 // loop_header
      %s15 = sphi 0, %s19
      %p16 = scmp.ge.s32.totalorder %s15, 4
      %s22 = sphi 0, %s34
      %s23 = sphi 0, %s30
      %s24 = sphi 0, %s22
      %s25 = sphi 0, %s23
      %s26 = sphi 0, %s24
      %s27 = sphi 0, %s25
      %s39 = sphi 0, %s41
      %s42 = sphi 0, %s39
      %s43 = sphi 0, %s42
      %s59 = sphi 0, %s43
      %s65 = sphi 0, %s67
      %s68 = sphi 0, %s65
      %s69 = sphi 0, %s68
      %s85 = sphi 0, %s69
      %s93 = sphi 0, %s95
      %s96 = sphi 0, %s93
      %s97 = sphi 0, %s96
      %s113 = sphi 0, %s97
    $region4: #{tpu_custom_call.1} parent=1 // loop_header_branch
      %18 = sbr.rel (%p16) target = $region8
    $region5: #{tpu_custom_call.1} parent=1 // loop_body
      %s20 = ssub.s32 %s15, 1
      %s21 = ssub.s32 %s15, 2
      %s28 = sadd.s32 1, %s23
      %p29 = scmp.ge.s32.totalorder %s28, 2
      %s30 = scalar_select %p29, 0, %s28
      %s31 = sadd.s32 1, %s22
      %s32 = scalar_select %p29, %s31, %s22
      %p33 = scmp.ge.s32.totalorder %s32, 1
      %s34 = scalar_select %p33, 0, %s32
      %s35 = ssub.s32 %s23, %s30
      %s36 = ssub.s32 %s22, %s34
      %s37 = sor.u32 %s35, %s36
      %p38 = scmp.eq.s32.totalorder %s37, 0
      %s40 = sadd.s32 %s39, 1
      %s41 = scalar_select %p38, %s39, %s40
      %p44 = pneg %p38
      %p45 = scmp.eq.s32.totalorder %s15, 1
      %p46 = por %p44, %p45
      %p47 = scmp.ne.s32.totalorder %s39, %s42
      %p48 = scmp.eq.s32.totalorder %s15, 0
      %p49 = por %p47, %p48
      %p50 = scmp.ne.s32.totalorder %s39, %s42
      %p51 = scmp.eq.s32.totalorder %s20, 1
      %p52 = por %p50, %p51
      %p53 = scmp.ne.s32.totalorder %s42, %s43
      %p54 = scmp.eq.s32.totalorder %s20, 0
      %p55 = por %p53, %p54
      %p56 = scmp.ne.s32.totalorder %s42, %s43
      %p57 = scmp.eq.s32.totalorder %s21, 1
      %p58 = por %p56, %p57
      %p60 = scmp.ne.s32.totalorder %s43, %s59
      %p61 = scmp.eq.s32.totalorder %s21, 0
      %p62 = por %p60, %p61
      %s63 = ssub.s32 %s22, %s34
      %p64 = scmp.eq.s32.totalorder %s63, 0
      %s66 = sadd.s32 %s65, 1
      %s67 = scalar_select %p64, %s65, %s66
      %p70 = pneg %p64
      %p71 = scmp.eq.s32.totalorder %s15, 1
      %p72 = por %p70, %p71
      %p73 = scmp.ne.s32.totalorder %s65, %s68
      %p74 = scmp.eq.s32.totalorder %s15, 0
      %p75 = por %p73, %p74
      %p76 = scmp.ne.s32.totalorder %s65, %s68
      %p77 = scmp.eq.s32.totalorder %s20, 1
      %p78 = por %p76, %p77
      %p79 = scmp.ne.s32.totalorder %s68, %s69
      %p80 = scmp.eq.s32.totalorder %s20, 0
      %p81 = por %p79, %p80
      %p82 = scmp.ne.s32.totalorder %s68, %s69
      %p83 = scmp.eq.s32.totalorder %s21, 1
      %p84 = por %p82, %p83
      %p86 = scmp.ne.s32.totalorder %s69, %s85
      %p87 = scmp.eq.s32.totalorder %s21, 0
      %p88 = por %p86, %p87
      %s89 = ssub.s32 %s23, %s30
      %s90 = ssub.s32 %s22, %s34
      %s91 = sor.u32 %s89, %s90
      %p92 = scmp.eq.s32.totalorder %s91, 0
      %s94 = sadd.s32 %s93, 1
      %s95 = scalar_select %p92, %s93, %s94
      %p98 = pneg %p92
      %p99 = scmp.eq.s32.totalorder %s15, 1
      %p100 = por %p98, %p99
      %p101 = scmp.ne.s32.totalorder %s93, %s96
      %p102 = scmp.eq.s32.totalorder %s15, 0
      %p103 = por %p101, %p102
      %p104 = scmp.ne.s32.totalorder %s93, %s96
      %p105 = scmp.eq.s32.totalorder %s20, 1
      %p106 = por %p104, %p105
      %p107 = scmp.ne.s32.totalorder %s96, %s97
      %p108 = scmp.eq.s32.totalorder %s20, 0
      %p109 = por %p107, %p108
      %p110 = scmp.ne.s32.totalorder %s96, %s97
      %p111 = scmp.eq.s32.totalorder %s21, 1
      %p112 = por %p110, %p111
      %p114 = scmp.ne.s32.totalorder %s97, %s113
      %p115 = scmp.eq.s32.totalorder %s21, 0
      %p116 = por %p114, %p115
      %p117 = scmp.le.s32.totalorder 1, %s15
      %p118 = scmp.lt.s32.totalorder %s15, 3
      %p119 = pnand %p117, %p118
      %p120 = pneg %p119
      // Predicated region
      $region9: #{tpu_custom_call.1} parent=5 // pred_check
        _
      $region10: #{tpu_custom_call.1} parent=5 // pred_check_branch
        %122 = sbr.rel (%p119) target = $region12
      $region11: #{tpu_custom_call.1} parent=5 // pred_region
        %s123 = ssub.s32 %s15, 1
        // Predicated region
        $region13: #{tpu_custom_call.1} parent=11 // pred_check
          %p124 = pneg %p81
        $region14: #{tpu_custom_call.1} parent=11 // pred_check_branch
          %126 = sbr.rel (%p124) target = $region16
        $region15: #{tpu_custom_call.1} parent=11 // pred_region
          %s128 = ssub.s32 64, 64
          %129 = vsyncadd [#allocation6], %s128
          %s130 = smul.addr %s24, 64
          %s131 = scalar_lea.hbm %s1, %s130
          %s133 = sshll.u32 [#allocation5], 4
          %s134 = int_to_ptr.vmem [resolvable:$true] %s133
          %136 = dma.hbm_to_vmem [thread:$0]  %s131, 64, %s134, [#allocation6]
        $region16: #{tpu_custom_call.1} parent=11 // pred_fallthru
          _
      $region12: #{tpu_custom_call.1} parent=5 // pred_fallthru
        _
      %p137 = scmp.lt.s32.totalorder %s15, 2
      // Predicated region
      $region17: #{tpu_custom_call.1} parent=5 // pred_check
        %p138 = pneg %p137
      $region18: #{tpu_custom_call.1} parent=5 // pred_check_branch
        %140 = sbr.rel (%p138) target = $region20
      $region19: #{tpu_custom_call.1} parent=5 // pred_region
        // Predicated region
        $region21: #{tpu_custom_call.1} parent=19 // pred_check
          %p141 = pneg %p49
        $region22: #{tpu_custom_call.1} parent=19 // pred_check_branch
          %143 = sbr.rel (%p141) target = $region24
        $region23: #{tpu_custom_call.1} parent=19 // pred_region
          %s144 = sand.u32 %s39, 1
          %s145 = scalar_lea.sflag [#allocation3], %s144
          %s146 = sand.u32 %s39, 1
          %s147 = smul.addr %s146, 64
          %s148 = scalar_lea.vmem [#allocation2], %s147
          %s149 = smul.u32 4, %s22
          %s151 = ssub.s32 1024, 1024
          %152 = vsyncadd %s145, %s151
          %s153 = smul.addr %s149, 2
          %s154 = smul.addr %s23, 8
          %s155 = sadd.s32 %s153, %s154
          %s156 = smul.addr %s155, 128
          %s157 = scalar_lea.hbm %s0, %s156
          %s158 = sshll.u32 %s148, 4
          %s159 = int_to_ptr.vmem [resolvable:$true] %s158
          %164 = dma.hbm_to_vmem [thread:$0]  %s157, 1024, %s159, %s145, 128, 128, 8
        $region24: #{tpu_custom_call.1} parent=19 // pred_fallthru
          _
      $region20: #{tpu_custom_call.1} parent=5 // pred_fallthru
        _
      %p165 = scmp.le.s32.totalorder 1, %s15
      %p166 = scmp.lt.s32.totalorder %s15, 3
      %p167 = pnand %p165, %p166
      %p168 = pneg %p167
      // Predicated region
      $region25: #{tpu_custom_call.1} parent=5 // pred_check
        _
      $region26: #{tpu_custom_call.1} parent=5 // pred_check_branch
        %170 = sbr.rel (%p167) target = $region28
      $region27: #{tpu_custom_call.1} parent=5 // pred_region
        %s171 = ssub.s32 %s15, 1
        %s172 = sand.u32 %s42, 1
        %s173 = scalar_lea.sflag [#allocation3], %s172
        %s174 = sand.u32 %s42, 1
        %s175 = smul.addr %s174, 64
        %s176 = scalar_lea.vmem [#allocation2], %s175
        // Predicated region
        $region29: #{tpu_custom_call.1} parent=27 // pred_check
          %p177 = pneg %p55
        $region30: #{tpu_custom_call.1} parent=27 // pred_check_branch
          %179 = sbr.rel (%p177) target = $region32
        $region31: #{tpu_custom_call.1} parent=27 // pred_region
          %180 = dma.done %s173, 1024
        $region32: #{tpu_custom_call.1} parent=27 // pred_fallthru
          _
        // Predicated region
        $region33: #{tpu_custom_call.1} parent=27 // pred_check
          %p181 = pneg %p81
        $region34: #{tpu_custom_call.1} parent=27 // pred_check_branch
          %183 = sbr.rel (%p181) target = $region36
        $region35: #{tpu_custom_call.1} parent=27 // pred_region
          %184 = dma.done [#allocation6], 64
        $region36: #{tpu_custom_call.1} parent=27 // pred_fallthru
          _
        %s185 = sand.u32 %s42, 1
        %s186 = scalar_lea.sflag [#allocation3], %s185
        %s187 = sand.u32 %s42, 1
        %s188 = smul.addr %s187, 64
        %s189 = scalar_lea.vmem [#allocation2], %s188
        %p190 = pneg %p55
        %p191 = pneg %p52
        %p192 = pneg %p81
        %p193 = pneg %p78
        %p194 = pneg %p109
        %p195 = pneg %p106
        %s196 = sand.u32 %s96, 1
        %s197 = scalar_lea.sflag [#allocation4], %s196
        %s198 = sand.u32 %s96, 1
        %s199 = smul.addr %s198, 4
        %s200 = scalar_lea.vmem [#allocation7], %s199
        %s201 = smul.u32 4, %s24
        %v202 = vld [vmem:[%s176] sm:$0xff]
        %v203 = vld [vmem:[%s176 + $0x8] sm:$0xff]
        %v204 = vld [vmem:[%s176 + $0x10] sm:$0xff]
        %v205 = vld [vmem:[%s176 + $0x18] sm:$0xff]
        %v206 = vld [vmem:[%s176 + $0x20] sm:$0xff]
        %v207 = vld [vmem:[%s176 + $0x28] sm:$0xff]
        %v208 = vld [vmem:[%s176 + $0x30] sm:$0xff]
        %v209 = vld [vmem:[%s176 + $0x38] sm:$0xff]
        %vm210 = vcmask 130048
        %v211 = vsel %vm210, %v202, 0.0
        %212 = vadd.xlane.f32.xlu0 %v211
        %v213 = vpop.xlane.xlu0 %212
        %v214 = vsel %vm210, %v203, 0.0
        %215 = vadd.xlane.f32.xlu0 %v214
        %v216 = vpop.xlane.xlu0 %215
        %v217 = vsel %vm210, %v204, 0.0
        %218 = vadd.xlane.f32.xlu0 %v217
        %v219 = vpop.xlane.xlu0 %218
        %v220 = vsel %vm210, %v205, 0.0
        %221 = vadd.xlane.f32.xlu0 %v220
        %v222 = vpop.xlane.xlu0 %221
        %v223 = vsel %vm210, %v206, 0.0
        %224 = vadd.xlane.f32.xlu0 %v223
        %v225 = vpop.xlane.xlu0 %224
        %v226 = vsel %vm210, %v207, 0.0
        %227 = vadd.xlane.f32.xlu0 %v226
        %v228 = vpop.xlane.xlu0 %227
        %v229 = vsel %vm210, %v208, 0.0
        %230 = vadd.xlane.f32.xlu0 %v229
        %v231 = vpop.xlane.xlu0 %230
        %v232 = vsel %vm210, %v209, 0.0
        %233 = vadd.xlane.f32.xlu0 %v232
        %v234 = vpop.xlane.xlu0 %233
        %v235 = vrcp.pop 16.0
        %v236 = vmul.f32 %v213, %v235
        %v237 = vmul.f32 %v216, %v235
        %v238 = vmul.f32 %v219, %v235
        %v239 = vmul.f32 %v222, %v235
        %v240 = vmul.f32 %v225, %v235
        %v241 = vmul.f32 %v228, %v235
        %v242 = vmul.f32 %v231, %v235
        %v243 = vmul.f32 %v234, %v235
        %v252 = vlaneseq
        %v253 = vand.u32 %v252, 127
        %v254 = vlaneseq
        %v255 = vshrl.u32 %v254, 7
        %v256 = vsub.s32 %v253, %v255
        %v257 = vrot.slane %v236, %v256
        %v258 = vadd.s32 %v253, 4294967288
        %v259 = vlaneseq
        %v260 = vshrl.u32 %v259, 7
        %v261 = vsub.s32 %v258, %v260
        %v262 = vrot.slane %v237, %v261
        %vm263 = vcmask 130112
        %v264 = vsel %vm263, %v262, %v257
        %v265 = vlaneseq
        %v266 = vshrl.u32 %v265, 7
        %v267 = vsub.s32 %v253, %v266
        %v268 = vrot.slane %v238, %v267
        %v269 = vlaneseq
        %v270 = vshrl.u32 %v269, 7
        %v271 = vsub.s32 %v258, %v270
        %v272 = vrot.slane %v239, %v271
        %v273 = vsel %vm263, %v272, %v268
        %v274 = vlaneseq
        %v275 = vshrl.u32 %v274, 7
        %v276 = vsub.s32 %v253, %v275
        %v277 = vrot.slane %v240, %v276
        %v278 = vlaneseq
        %v279 = vshrl.u32 %v278, 7
        %v280 = vsub.s32 %v258, %v279
        %v281 = vrot.slane %v241, %v280
        %v282 = vsel %vm263, %v281, %v277
        %v283 = vlaneseq
        %v284 = vshrl.u32 %v283, 7
        %v285 = vsub.s32 %v253, %v284
        %v286 = vrot.slane %v242, %v285
        %v287 = vlaneseq
        %v288 = vshrl.u32 %v287, 7
        %v289 = vsub.s32 %v258, %v288
        %v290 = vrot.slane %v243, %v289
        %v291 = vsel %vm263, %v290, %v286
        %vm292 = vcmask 1041409
        %v293 = vsel %vm292, %v273, %v264
        %vm294 = vcmask 1042434
        %v295 = vsel %vm294, %v282, %v293
        %vm296 = vcmask 1043459
        %v297 = vsel %vm296, %v291, %v295
        %vm299 = vcmask 125952
        %v300 = vsel %vm299, %v297, 0.0
        %301 = vadd.xlane.f32.xlu0 %v300
        %v302 = vpop.xlane.xlu0 %301
        %v303 = vmul.f32 %v302, %v235
        %v305 = vlaneseq
        %v306 = vshrl.u32 %v305, 7
        %v307 = vsub.s32 0, %v306
        %v308 = vrot.slane %v303, %v307
        %v309 = vlaneseq
        %v310 = vshrl.u32 %v309, 7
        %v311 = vsub.s32 1, %v310
        %v312 = vrot.slane %v303, %v311
        %v313 = vlaneseq
        %v314 = vshrl.u32 %v313, 7
        %v315 = vsub.s32 2, %v314
        %v316 = vrot.slane %v303, %v315
        %v317 = vlaneseq
        %v318 = vshrl.u32 %v317, 7
        %v319 = vsub.s32 3, %v318
        %v320 = vrot.slane %v303, %v319
        %v325 = vadd.f32 %v236, %v308
        %v326 = vadd.f32 %v237, %v308
        %v327 = vadd.f32 %v238, %v312
        %v328 = vadd.f32 %v239, %v312
        %v329 = vadd.f32 %v240, %v316
        %v330 = vadd.f32 %v241, %v316
        %v331 = vadd.f32 %v242, %v320
        %v332 = vadd.f32 %v243, %v320
        %v333 = vld [vmem:[#allocation5] sm:$0xf]
        %342 = vset.pattern.permute.xlu0 0
        %343 = vperm.xlu0 %342, %v325
        %v344 = vpop.permute.xlu0 %343
        %345 = vset.pattern.permute.xlu0 0
        %346 = vperm.xlu0 %345, %v326
        %v347 = vpop.permute.xlu0 %346
        %348 = vset.pattern.permute.xlu0 0
        %349 = vperm.xlu0 %348, %v327
        %v350 = vpop.permute.xlu0 %349
        %351 = vset.pattern.permute.xlu0 0
        %352 = vperm.xlu0 %351, %v328
        %v353 = vpop.permute.xlu0 %352
        %354 = vset.pattern.permute.xlu0 0
        %355 = vperm.xlu0 %354, %v329
        %v356 = vpop.permute.xlu0 %355
        %357 = vset.pattern.permute.xlu0 0
        %358 = vperm.xlu0 %357, %v330
        %v359 = vpop.permute.xlu0 %358
        %360 = vset.pattern.permute.xlu0 0
        %361 = vperm.xlu0 %360, %v331
        %v362 = vpop.permute.xlu0 %361
        %363 = vset.pattern.permute.xlu0 0
        %364 = vperm.xlu0 %363, %v332
        %v365 = vpop.permute.xlu0 %364
        %v366 = vadd.s32 %v253, 4294967295
        %v367 = vlaneseq
        %v368 = vshrl.u32 %v367, 7
        %v369 = vsub.s32 %v366, %v368
        %v370 = vrot.slane %v344, %v369
        %v371 = vadd.s32 %v253, 4294967287
        %v372 = vlaneseq
        %v373 = vshrl.u32 %v372, 7
        %v374 = vsub.s32 %v371, %v373
        %v375 = vrot.slane %v347, %v374
        %vm376 = vcmask 138312
        %v377 = vsel %vm376, %v375, %v370
        %v378 = vlaneseq
        %v379 = vshrl.u32 %v378, 7
        %v380 = vsub.s32 %v366, %v379
        %v381 = vrot.slane %v350, %v380
        %v382 = vlaneseq
        %v383 = vshrl.u32 %v382, 7
        %v384 = vsub.s32 %v371, %v383
        %v385 = vrot.slane %v353, %v384
        %v386 = vsel %vm376, %v385, %v381
        %v387 = vlaneseq
        %v388 = vshrl.u32 %v387, 7
        %v389 = vsub.s32 %v366, %v388
        %v390 = vrot.slane %v356, %v389
        %v391 = vlaneseq
        %v392 = vshrl.u32 %v391, 7
        %v393 = vsub.s32 %v371, %v392
        %v394 = vrot.slane %v359, %v393
        %v395 = vsel %vm376, %v394, %v390
        %v396 = vlaneseq
        %v397 = vshrl.u32 %v396, 7
        %v398 = vsub.s32 %v366, %v397
        %v399 = vrot.slane %v362, %v398
        %v400 = vlaneseq
        %v401 = vshrl.u32 %v400, 7
        %v402 = vsub.s32 %v371, %v401
        %v403 = vrot.slane %v365, %v402
        %v404 = vsel %vm376, %v403, %v399
        %v405 = vsel %vm292, %v386, %v377
        %v406 = vsel %vm294, %v395, %v405
        %v407 = vsel %vm296, %v404, %v406
        %vm409 = vcmask 7168
        %v410 = vsel %vm409, 0.0, %v407
        %v411 = vadd.s32 %v253, 1
        %v412 = vlaneseq
        %v413 = vshrl.u32 %v412, 7
        %v414 = vsub.s32 %v411, %v413
        %v415 = vrot.slane %v344, %v414
        %v416 = vadd.s32 %v253, 4294967289
        %v417 = vlaneseq
        %v418 = vshrl.u32 %v417, 7
        %v419 = vsub.s32 %v416, %v418
        %v420 = vrot.slane %v347, %v419
        %vm421 = vcmask 121912
        %v422 = vsel %vm421, %v420, %v415
        %v423 = vlaneseq
        %v424 = vshrl.u32 %v423, 7
        %v425 = vsub.s32 %v411, %v424
        %v426 = vrot.slane %v350, %v425
        %v427 = vlaneseq
        %v428 = vshrl.u32 %v427, 7
        %v429 = vsub.s32 %v416, %v428
        %v430 = vrot.slane %v353, %v429
        %v431 = vsel %vm421, %v430, %v426
        %v432 = vlaneseq
        %v433 = vshrl.u32 %v432, 7
        %v434 = vsub.s32 %v411, %v433
        %v435 = vrot.slane %v356, %v434
        %v436 = vlaneseq
        %v437 = vshrl.u32 %v436, 7
        %v438 = vsub.s32 %v416, %v437
        %v439 = vrot.slane %v359, %v438
        %v440 = vsel %vm421, %v439, %v435
        %v441 = vlaneseq
        %v442 = vshrl.u32 %v441, 7
        %v443 = vsub.s32 %v411, %v442
        %v444 = vrot.slane %v362, %v443
        %v445 = vlaneseq
        %v446 = vshrl.u32 %v445, 7
        %v447 = vsub.s32 %v416, %v446
        %v448 = vrot.slane %v365, %v447
        %v449 = vsel %vm421, %v448, %v444
        %v450 = vsel %vm294, %v431, %v422
        %v451 = vsel %vm296, %v440, %v450
        %vm452 = vcmask 1044484
        %v453 = vsel %vm452, %v449, %v451
        %vm455 = vcmask 121856
        %v456 = vsel %vm455, %v453, 0.0
        %458 = vset.pattern.permute.xlu0 0
        %459 = vperm.xlu0 %458, %v333
        %v460 = vpop.permute.xlu0 %459
        %v462 = vmul.f32 %v460, %v410
        %463 = vset.pattern.permute.xlu0 1
        %464 = vperm.xlu0 %463, %v333
        %v465 = vpop.permute.xlu0 %464
        %v467 = vlaneseq
        %v468 = vshrl.u32 %v467, 7
        %v469 = vsub.s32 %v253, %v468
        %v470 = vrot.slane %v344, %v469
        %v471 = vlaneseq
        %v472 = vshrl.u32 %v471, 7
        %v473 = vsub.s32 %v258, %v472
        %v474 = vrot.slane %v347, %v473
        %v475 = vsel %vm263, %v474, %v470
        %v476 = vlaneseq
        %v477 = vshrl.u32 %v476, 7
        %v478 = vsub.s32 %v253, %v477
        %v479 = vrot.slane %v350, %v478
        %v480 = vlaneseq
        %v481 = vshrl.u32 %v480, 7
        %v482 = vsub.s32 %v258, %v481
        %v483 = vrot.slane %v353, %v482
        %v484 = vsel %vm263, %v483, %v479
        %v485 = vlaneseq
        %v486 = vshrl.u32 %v485, 7
        %v487 = vsub.s32 %v253, %v486
        %v488 = vrot.slane %v356, %v487
        %v489 = vlaneseq
        %v490 = vshrl.u32 %v489, 7
        %v491 = vsub.s32 %v258, %v490
        %v492 = vrot.slane %v359, %v491
        %v493 = vsel %vm263, %v492, %v488
        %v494 = vlaneseq
        %v495 = vshrl.u32 %v494, 7
        %v496 = vsub.s32 %v253, %v495
        %v497 = vrot.slane %v362, %v496
        %v498 = vlaneseq
        %v499 = vshrl.u32 %v498, 7
        %v500 = vsub.s32 %v258, %v499
        %v501 = vrot.slane %v365, %v500
        %v502 = vsel %vm263, %v501, %v497
        %v503 = vsel %vm292, %v484, %v475
        %v504 = vsel %vm294, %v493, %v503
        %v505 = vsel %vm296, %v502, %v504
        %v507 = vmul.f32 %v465, %v505
        %v508 = vadd.f32 %v462, %v507
        %509 = vset.pattern.permute.xlu0 2
        %510 = vperm.xlu0 %509, %v333
        %v511 = vpop.permute.xlu0 %510
        %v514 = vrot.slane %v456, 1
        %v516 = vmul.f32 %v511, %v514
        %v517 = vadd.f32 %v508, %v516
        %518 = vset.pattern.permute.xlu0 3
        %519 = vperm.xlu0 %518, %v333
        %v520 = vpop.permute.xlu0 %519
        %v522 = vmul.f32 %v517, %v520
        %523 = vset.pattern.permute.xlu0 4
        %524 = vperm.xlu0 %523, %v333
        %v525 = vpop.permute.xlu0 %524
        %v527 = vadd.f32 %v522, %v525
        %v528 = vadd.f32 %v527, 3.0
        %v529 = vmax.f32 %v528, 0.0
        %v530 = vmin.f32 %v529, 6.0
        %v531 = vmul.f32 %v527, %v530
        %v532 = vmul.f32 %v531, 0.16666667
        %534 = vrot.lane.b32.xlu0 %v532, 1
        %v535 = vpop.permute.xlu0 %534
        %v537 = vsel %vm409, 0.0, %v535
        %538 = vrot.lane.b32.xlu0 %v532, 127
        %v539 = vpop.permute.xlu0 %538
        %v541 = vsel %vm455, %v539, 0.0
        %542 = vset.pattern.permute.xlu0 5
        %543 = vperm.xlu0 %542, %v333
        %v544 = vpop.permute.xlu0 %543
        %v546 = vmul.f32 %v544, %v537
        %547 = vset.pattern.permute.xlu0 6
        %548 = vperm.xlu0 %547, %v333
        %v549 = vpop.permute.xlu0 %548
        %v551 = vmul.f32 %v549, %v532
        %v552 = vadd.f32 %v546, %v551
        %553 = vset.pattern.permute.xlu0 7
        %554 = vperm.xlu0 %553, %v333
        %v555 = vpop.permute.xlu0 %554
        %v557 = vmul.f32 %v555, %v541
        %v558 = vadd.f32 %v552, %v557
        %559 = vst.msk [vmem:[%s200] sm:$0xf] %vm299, %v558
        %s560 = sand.u32 %s96, 1
        %s561 = scalar_lea.sflag [#allocation4], %s560
        %s562 = sand.u32 %s96, 1
        %s563 = smul.addr %s562, 4
        %s564 = scalar_lea.vmem [#allocation7], %s563
        // Predicated region
        $region37: #{tpu_custom_call.1} parent=27 // pred_check
          %p565 = pneg %p106
        $region38: #{tpu_custom_call.1} parent=27 // pred_check_branch
          %567 = sbr.rel (%p565) target = $region40
        $region39: #{tpu_custom_call.1} parent=27 // pred_region
          %s569 = ssub.s32 64, 64
          %570 = vsyncadd %s561, %s569
          %s571 = sadd.s32 %s24, %s25
          %s572 = smul.addr %s571, 64
          %s573 = scalar_lea.hbm %s2, %s572
          %s575 = sshll.u32 %s564, 4
          %s576 = int_to_ptr.vmem [resolvable:$true] %s575
          %578 = dma.vmem_to_hbm [thread:$0]  %s576, 64, %s573, %s561
        $region40: #{tpu_custom_call.1} parent=27 // pred_fallthru
          _
      $region28: #{tpu_custom_call.1} parent=5 // pred_fallthru
        _
      %p579 = scmp.le.s32.totalorder 2, %s15
      // Predicated region
      $region41: #{tpu_custom_call.1} parent=5 // pred_check
        %p580 = pneg %p579
      $region42: #{tpu_custom_call.1} parent=5 // pred_check_branch
        %582 = sbr.rel (%p580) target = $region44
      $region43: #{tpu_custom_call.1} parent=5 // pred_region
        %s583 = ssub.s32 %s15, 2
        // Predicated region
        $region45: #{tpu_custom_call.1} parent=43 // pred_check
          %p584 = pneg %p112
        $region46: #{tpu_custom_call.1} parent=43 // pred_check_branch
          %586 = sbr.rel (%p584) target = $region48
        $region47: #{tpu_custom_call.1} parent=43 // pred_region
          %s587 = sand.u32 %s97, 1
          %s588 = scalar_lea.sflag [#allocation4], %s587
          %s589 = sand.u32 %s97, 1
          %s590 = smul.addr %s589, 4
          %s591 = scalar_lea.vmem [#allocation7], %s590
          %592 = dma.done %s588, 64
        $region48: #{tpu_custom_call.1} parent=43 // pred_fallthru
          _
      $region44: #{tpu_custom_call.1} parent=5 // pred_fallthru
        _
    $region6: #{tpu_custom_call.1} parent=1 // loop_footer
      %s19 = sadd.s32 1, %s15
    $region7: #{tpu_custom_call.1} parent=1 // loop_footer_branch
      %14 = sbr.rel target = $region3
    $region8: #{tpu_custom_call.1} parent=1 // loop_exit
      _
    %593 = vsyncpa [#allocation3], 1
    %s594 = scalar_lea.sflag [#allocation3], 1
    %595 = vsyncpa %s594, 1
    %596 = vsyncpa [#allocation6], 1
    %597 = vsyncpa [#allocation4], 1
    %s598 = scalar_lea.sflag [#allocation4], 1
    %599 = vsyncpa %s598, 1

</llo_original>
